<compile_context>
chip_gen: v5e
topology: v5e:2x2
jax: 0.10.0
libtpu: 0.0.40
codegen_flags: <defaults>
</compile_context>

<pallas_src>
import functools

import numpy as np
import jax
import jax.numpy as jnp
from jax import lax
from jax.experimental import pallas as pl
from jax.experimental.pallas import tpu as pltpu


ACT_DTYPE = jnp.bfloat16          # activation storage dtype between kernels (compute is f32)
NODE_TILE = 256                   # node rows per grid step (edge rows per step = NODE_TILE * E)
VMEM_LIMIT = 48 * 1024 * 1024     # explicit scoped-VMEM cap (safe on v5e/v6e/v7x)


def _cparams():
    return pltpu.CompilerParams(dimension_semantics=("parallel",),
                                vmem_limit_bytes=VMEM_LIMIT)


def _node_tile(n_rows, cap=NODE_TILE):
    """Pick a node-row tile: multiple of 8, and >=2 grid steps when possible (v7x megacore)."""
    t = min(cap, n_rows)
    if t == n_rows and n_rows >= 16 and n_rows % 2 == 0:
        t = n_rows // 2
    if t != n_rows:
        t = max(8, (t // 8) * 8)
    return t


# ----------------------------- embeddings -----------------------------

def _node_embed_kernel(x_ref, w_ref, o_ref, *, node_dim):
    # tiny K (2..6): VPU outer-product accumulation instead of an MXU dot
    x = x_ref[...]
    w = w_ref[...]
    acc = x[:, 0:1] * w[0:1, :]
    for k in range(1, node_dim):
        acc = acc + x[:, k:k + 1] * w[k:k + 1, :]
    o_ref[...] = acc.astype(o_ref.dtype)


def node_embed(x_flat, w, tile_n):
    nN, node_dim = x_flat.shape
    H = w.shape[1]
    gn = pl.cdiv(nN, tile_n)
    return pl.pallas_call(
        functools.partial(_node_embed_kernel, node_dim=node_dim),
        out_shape=jax.ShapeDtypeStruct((nN, H), ACT_DTYPE),
        grid=(gn,),
        in_specs=[pl.BlockSpec((tile_n, node_dim), lambda i: (i, 0)),
                  pl.BlockSpec((node_dim, H), lambda i: (0, 0))],
        out_specs=pl.BlockSpec((tile_n, H), lambda i: (i, 0)),
        compiler_params=_cparams(),
    )(x_flat.astype(jnp.float32), w.astype(jnp.float32))


def _edge_embed_kernel(xe_ref, w_ref, o_ref):
    # K = 1  ->  broadcast multiply on the VPU
    o_ref[...] = (xe_ref[...] * w_ref[...]).astype(o_ref.dtype)


def edge_embed(xe_flat, w, tile_n, n_edge):
    nE = xe_flat.shape[0]
    H = w.shape[-1]
    gn = pl.cdiv(nE, tile_n * n_edge)
    return pl.pallas_call(
        _edge_embed_kernel,
        out_shape=jax.ShapeDtypeStruct((nE, H), ACT_DTYPE),
        grid=(gn,),
        in_specs=[pl.BlockSpec((tile_n * n_edge, 1), lambda i: (i, 0)),
                  pl.BlockSpec((1, H), lambda i: (0, 0))],
        out_specs=pl.BlockSpec((tile_n * n_edge, H), lambda i: (i, 0)),
        compiler_params=_cparams(),
    )(xe_flat.astype(jnp.float32), w.reshape(1, H).astype(jnp.float32))


# ------------- fused per-layer kernel: 5 projections + edge conv + gated aggregation + BN stats -------------

def _layer_main_kernel(e_ref, einv_ref, xnb_ref, xown_ref,
                       wue_ref, wwe_ref, wxnb_ref, bxnb_ref, wown_ref, bown_ref,
                       etmp_ref, xtmp_ref, stats_ref, *, n_nodes, tile_n, n_edge):
    f32 = jnp.float32
    TN, E = tile_n, n_edge
    H = xown_ref.shape[-1]

    # per-edge projections (bf16 x bf16 -> f32 on the MXU)
    d = (jnp.dot(e_ref[...], wue_ref[...], preferred_element_type=f32)
         + jnp.dot(einv_ref[...], wwe_ref[...], preferred_element_type=f32))         # Ue + We_inv
    d3 = jnp.dot(xnb_ref[...], wxnb_ref[...], preferred_element_type=f32) + bxnb_ref[...]
    e_edge = d + d3[:, :H]                       # (TN*E, H): Ue + We_inv + Vx(x_j) + biases
    vn_nb = d3[:, H:]                            # (TN*E, H): Vn(x_j)

    # per-node projections
    no = jnp.dot(xown_ref[...], wown_ref[...], preferred_element_type=f32) + bown_ref[...]
    vx_own = no[:, :H]                           # (TN, H): Vx(x_i)
    ux = no[:, H:]                               # (TN, H): Un(x_i)

    # edge convolution
    e_tmp = e_edge.reshape(TN, E, H) + vx_own[:, None, :]                              # (TN, E, H)
    etmp_ref[...] = e_tmp.astype(etmp_ref.dtype)

    # gated mean aggregation (sigmoid exp -> EUP)
    gate = 1.0 / (1.0 + jnp.exp(-e_tmp))
    num = jnp.sum(gate * vn_nb.reshape(TN, E, H), axis=1)                              # (TN, H)
    den = jnp.sum(gate, axis=1) + 1e-20
    x_tmp = ux + num / den
    xtmp_ref[...] = x_tmp.astype(xtmp_ref.dtype)

    # fused per-tile BatchNorm partial statistics (mask rows beyond n_nodes), one 4H-wide store
    ridx = pl.program_id(0) * TN + lax.broadcasted_iota(jnp.int32, (TN, 1), 0)
    valid = (ridx < n_nodes).astype(f32)                                               # (TN, 1)
    e_rs = jnp.sum(e_tmp, axis=1) * valid
    e_rq = jnp.sum(e_tmp * e_tmp, axis=1) * valid
    stats = jnp.concatenate(
        [jnp.sum(e_rs, axis=0, keepdims=True),
         jnp.sum(e_rq, axis=0, keepdims=True),
         jnp.sum(x_tmp * valid, axis=0, keepdims=True),
         jnp.sum(x_tmp * x_tmp * valid, axis=0, keepdims=True)], axis=-1)              # (1, 4H)
    stats_ref[...] = stats.reshape(1, 1, 4 * H)


def layer_main(e, e_inv, x_nb, x, lw, n_edge, tile_n):
    nN, H = x.shape
    E = n_edge
    TN = tile_n
    gn = pl.cdiv(nN, TN)
    espec = pl.BlockSpec((TN * E, H), lambda i: (i, 0))
    nspec = pl.BlockSpec((TN, H), lambda i: (i, 0))

    def wspec(shape):
        return pl.BlockSpec(shape, lambda i: (0, 0))

    return pl.pallas_call(
        functools.partial(_layer_main_kernel, n_nodes=nN, tile_n=TN, n_edge=E),
        out_shape=(jax.ShapeDtypeStruct((nN, E, H), ACT_DTYPE),       # e_tmp
                   jax.ShapeDtypeStruct((nN, H), jnp.float32),        # x_tmp
                   jax.ShapeDtypeStruct((gn, 1, 4 * H), jnp.float32)),
        grid=(gn,),
        in_specs=[espec, espec, espec, nspec,
                  wspec((H, H)), wspec((H, H)),
                  wspec((H, 2 * H)), wspec((1, 2 * H)),
                  wspec((H, 2 * H)), wspec((1, 2 * H))],
        out_specs=(pl.BlockSpec((TN, E, H), lambda i: (i, 0, 0)),
                   nspec,
                   pl.BlockSpec((1, 1, 4 * H), lambda i: (i, 0, 0))),
        compiler_params=_cparams(),
    )(e, e_inv, x_nb, x,
      lw["wue"], lw["wwe"], lw["wxnb"], lw["bxnb"], lw["wown"], lw["bown"])


# ----------------------------- fused BN + ReLU + residual (x and e paths, lane-dense) -----------------------------

def _bn_apply_kernel(etmp_ref, eres_ref, esc_ref, esh_ref,
                     xtmp_ref, xres_ref, xsc_ref, xsh_ref,
                     eout_ref, xout_ref):
    f32 = jnp.float32
    et = etmp_ref[...].astype(f32)
    eout_ref[...] = (eres_ref[...].astype(f32)
                     + jnp.maximum(et * esc_ref[...] + esh_ref[...], 0.0)).astype(eout_ref.dtype)
    xt = xtmp_ref[...].astype(f32)
    xout_ref[...] = (xres_ref[...].astype(f32)
                     + jnp.maximum(xt * xsc_ref[...] + xsh_ref[...], 0.0)).astype(xout_ref.dtype)


def bn_apply(e_tmp2, e_res2, e_scale, e_shift, x_tmp, x_res, x_scale, x_shift, tile_n):
    nN, EH = e_tmp2.shape
    H = x_tmp.shape[-1]
    TN = tile_n
    gn = pl.cdiv(nN, TN)
    erow = pl.BlockSpec((TN, EH), lambda i: (i, 0))
    evec = pl.BlockSpec((1, EH), lambda i: (0, 0))
    xrow = pl.BlockSpec((TN, H), lambda i: (i, 0))
    xvec = pl.BlockSpec((1, H), lambda i: (0, 0))
    return pl.pallas_call(
        _bn_apply_kernel,
        out_shape=(jax.ShapeDtypeStruct((nN, EH), ACT_DTYPE),
                   jax.ShapeDtypeStruct((nN, H), ACT_DTYPE)),
        grid=(gn,),
        in_specs=[erow, erow, evec, evec, xrow, xrow, xvec, xvec],
        out_specs=(erow, xrow),
        compiler_params=_cparams(),
    )(e_tmp2, e_res2, e_scale, e_shift, x_tmp, x_res, x_scale, x_shift)


# ----------------------------- fused MLP heads -----------------------------

def _edge_head_kernel(*refs, n_hidden, n_edge, tile_n):
    # edge MLP + per-node softmax normalisation (log p, log(1-p)) in one kernel
    f32 = jnp.float32
    e_ref = refs[0]
    logp_ref, log1mp_ref = refs[-2], refs[-1]
    ws = refs[1:-2]
    H = e_ref.shape[-1]
    h = e_ref[...].astype(f32)
    for i in range(n_hidden):
        h = jnp.maximum(jnp.dot(h, ws[2 * i][...], preferred_element_type=f32) + ws[2 * i + 1][...], 0.0)
    w_out = ws[2 * n_hidden][...]          # (1, 1, H)
    b_out = ws[2 * n_hidden + 1][...]      # (1, 1)
    h3 = h.reshape(tile_n, n_edge, H)
    logits = jnp.sum(h3 * w_out, axis=-1) + b_out                    # (TN, E)
    # p = exp(l) / (sum_E exp(l) + 1e-5), computed stably with max subtraction
    m = jnp.maximum(jnp.max(logits, axis=-1, keepdims=True), -80.0)
    z = jnp.exp(logits - m)
    s = jnp.sum(z, axis=-1, keepdims=True)
    denom = s + 1e-5 * jnp.exp(-m)
    p = z / denom
    logp_ref[...] = (logits - m) - jnp.log(denom)
    log1mp_ref[...] = jnp.log(1.0 - p)     # matches torch.log(1 - p)


def edge_head(e, hidden_layers, out_layer, tile_n, n_edge):
    nE, H = e.shape
    nN = nE // n_edge
    TN = tile_n
    gn = pl.cdiv(nN, TN)
    w_out, b_out = out_layer
    f32 = jnp.float32
    args = [e]
    in_specs = [pl.BlockSpec((TN * n_edge, H), lambda i: (i, 0))]
    for (w, b) in hidden_layers:
        args += [w.astype(f32), b.reshape(1, -1).astype(f32)]
        in_specs += [pl.BlockSpec(w.shape, lambda i: (0, 0)),
                     pl.BlockSpec((1, w.shape[1]), lambda i: (0, 0))]
    args += [w_out.reshape(1, 1, H).astype(f32), b_out.reshape(1, 1).astype(f32)]
    in_specs += [pl.BlockSpec((1, 1, H), lambda i: (0, 0, 0)),
                 pl.BlockSpec((1, 1), lambda i: (0, 0))]
    row = pl.BlockSpec((TN, n_edge), lambda i: (i, 0))
    return pl.pallas_call(
        functools.partial(_edge_head_kernel, n_hidden=len(hidden_layers), n_edge=n_edge, tile_n=TN),
        out_shape=(jax.ShapeDtypeStruct((nN, n_edge), f32),
                   jax.ShapeDtypeStruct((nN, n_edge), f32)),
        grid=(gn,),
        in_specs=in_specs,
        out_specs=(row, row),
        compiler_params=_cparams(),
    )(*args)


def _node_head_kernel(*refs, n_hidden):
    f32 = jnp.float32
    x_ref = refs[0]
    out_ref = refs[-1]
    ws = refs[1:-1]
    h = x_ref[...].astype(f32)
    for i in range(n_hidden):
        h = jnp.maximum(jnp.dot(h, ws[2 * i][...], preferred_element_type=f32) + ws[2 * i + 1][...], 0.0)
    w_out = ws[2 * n_hidden][...]          # (1, H)
    b_out = ws[2 * n_hidden + 1][...]      # (1, 1)
    y = jnp.sum(h * w_out, axis=-1, keepdims=True) + b_out           # (TN, 1)
    out_ref[...] = 10.0 * jnp.tanh(y)


def node_head(x, hidden_layers, out_layer, tile_n):
    nN, H = x.shape
    TN = tile_n
    gn = pl.cdiv(nN, TN)
    w_out, b_out = out_layer
    f32 = jnp.float32
    args = [x]
    in_specs = [pl.BlockSpec((TN, H), lambda i: (i, 0))]
    for (w, b) in hidden_layers:
        args += [w.astype(f32), b.reshape(1, -1).astype(f32)]
        in_specs += [pl.BlockSpec(w.shape, lambda i: (0, 0)),
                     pl.BlockSpec((1, w.shape[1]), lambda i: (0, 0))]
    args += [w_out.reshape(1, H).astype(f32), b_out.reshape(1, 1).astype(f32)]
    in_specs += [pl.BlockSpec((1, H), lambda i: (0, 0)),
                 pl.BlockSpec((1, 1), lambda i: (0, 0))]
    return pl.pallas_call(
        functools.partial(_node_head_kernel, n_hidden=len(hidden_layers)),
        out_shape=jax.ShapeDtypeStruct((nN, 1), f32),
        grid=(gn,),
        in_specs=in_specs,
        out_specs=pl.BlockSpec((TN, 1), lambda i: (i, 0)),
        compiler_params=_cparams(),
    )(*args)


# ----------------------------- parameters -----------------------------

def _init_linear(key, fan_in, fan_out, bias=True):
    kw, kb = jax.random.split(key)
    bound = 1.0 / np.sqrt(fan_in)
    w = jax.random.uniform(kw, (fan_in, fan_out), jnp.float32, -bound, bound)
    b = jax.random.uniform(kb, (fan_out,), jnp.float32, -bound, bound) if bias else None
    return w, b


def init_sparse_gcn_params(key, hidden_dim=32, n_gcn_layers=3, n_mlp_layers=3, problem="tsp"):
    node_dim = {"tsp": 2, "cvrp": 4, "pdp": 5, "cvrptw": 6}[problem]
    edge_dim = 1
    keys = jax.random.split(key, 4 + n_gcn_layers)
    params = {"hidden_dim": hidden_dim, "node_dim": node_dim}
    params["node_emb_w"], _ = _init_linear(keys[0], node_dim, hidden_dim, bias=False)
    params["edge_emb_w"], _ = _init_linear(keys[1], edge_dim, hidden_dim, bias=False)

    layers = []
    for l in range(n_gcn_layers):
        lk = jax.random.split(keys[4 + l], 5)
        Ue_w, Ue_b = _init_linear(lk[0], hidden_dim, hidden_dim)
        Vx_w, Vx_b = _init_linear(lk[1], hidden_dim, hidden_dim)
        We_w, We_b = _init_linear(lk[2], hidden_dim, hidden_dim)
        Un_w, Un_b = _init_linear(lk[3], hidden_dim, hidden_dim)
        Vn_w, Vn_b = _init_linear(lk[4], hidden_dim, hidden_dim)
        layers.append(dict(
            Ue_w=Ue_w, Ue_b=Ue_b, Vx_w=Vx_w, Vx_b=Vx_b, We_w=We_w, We_b=We_b,
            Un_w=Un_w, Un_b=Un_b, Vn_w=Vn_w, Vn_b=Vn_b,
            bn_e_g=jnp.ones((hidden_dim,), jnp.float32),
            bn_e_b=jnp.zeros((hidden_dim,), jnp.float32),
            bn_x_g=jnp.ones((hidden_dim,), jnp.float32),
            bn_x_b=jnp.zeros((hidden_dim,), jnp.float32)))
    params["gcn_layers"] = layers

    mk = jax.random.split(keys[2], n_mlp_layers)
    params["mlp_e_hidden"] = [_init_linear(mk[i], hidden_dim, hidden_dim) for i in range(n_mlp_layers - 1)]
    params["mlp_e_out"] = _init_linear(mk[-1], hidden_dim, 1)
    nk = jax.random.split(keys[3], n_mlp_layers)
    params["mlp_n_hidden"] = [_init_linear(nk[i], hidden_dim, hidden_dim) for i in range(n_mlp_layers - 1)]
    params["mlp_n_out"] = _init_linear(nk[-1], hidden_dim, 1)
    return params


def _fuse_layer(lp):
    """Concatenate per-layer weights once (bf16) so the fused kernel does 3 MXU dots per tile."""
    bf, f32 = ACT_DTYPE, jnp.float32
    return dict(
        wue=lp["Ue_w"].astype(bf),                                              # (H, H)
        wwe=lp["We_w"].astype(bf),                                              # (H, H)
        wxnb=jnp.concatenate([lp["Vx_w"], lp["Vn_w"]], axis=1).astype(bf),      # (H, 2H)
        bxnb=jnp.concatenate([lp["Ue_b"] + lp["We_b"] + lp["Vx_b"], lp["Vn_b"]]).reshape(1, -1).astype(f32),
        wown=jnp.concatenate([lp["Vx_w"], lp["Un_w"]], axis=1).astype(bf),      # (H, 2H)
        bown=jnp.concatenate([lp["Vx_b"], lp["Un_b"]]).reshape(1, -1).astype(f32),
        bn_e_g=lp["bn_e_g"], bn_e_b=lp["bn_e_b"],
        bn_x_g=lp["bn_x_g"], bn_x_b=lp["bn_x_b"])


# ----------------------------- model forward -----------------------------

def sparse_gcn_forward(params, x_nodes, x_edges, edge_index, inverse_edge_index,
                       y_edges, edge_cw, n_edges):
    B, V, node_dim = x_nodes.shape
    H = params["hidden_dim"]
    E = n_edges
    nN = B * V
    nE = nN * E
    f32 = jnp.float32
    TN = _node_tile(nN)

    # embeddings
    x = node_embed(x_nodes.reshape(nN, node_dim), params["node_emb_w"], TN)        # (nN, H) bf16
    e = edge_embed(x_edges.reshape(nE, 1), params["edge_emb_w"], TN, E)            # (nE, H) bf16

    loss_mask = (edge_index.reshape(B, V, E).sum(-1) != 0)                         # (B, V)
    ei = edge_index.reshape(B, V * E).astype(jnp.int32)
    iei = inverse_edge_index.reshape(B, V * E).astype(jnp.int32)

    fused_layers = [_fuse_layer(lp) for lp in params["gcn_layers"]]

    for lw in fused_layers:
        # data-dependent gathers stay in XLA (bf16); TODO(synk): in-kernel gather would remove them
        x_nb = jnp.take_along_axis(x.reshape(B, V, H), ei[:, :, None], axis=1).reshape(nE, H)
        e_inv = jnp.take_along_axis(e.reshape(B, V * E, H), iei[:, :, None], axis=1).reshape(nE, H)

        # fused: all 5 projections + edge conv + gated aggregation + per-tile BN stats
        e_tmp, x_tmp, stats = layer_main(e, e_inv, x_nb, x, lw, E, TN)

        st = stats.reshape(-1, 4 * H).sum(axis=0)
        e_mean = st[:H] / nE
        e_var = jnp.maximum(st[H:2 * H] / nE - e_mean * e_mean, 0.0)
        x_mean = st[2 * H:3 * H] / nN
        x_var = jnp.maximum(st[3 * H:] / nN - x_mean * x_mean, 0.0)
        e_scale = lw["bn_e_g"] * lax.rsqrt(e_var + 1e-5)
        e_shift = lw["bn_e_b"] - e_mean * e_scale
        x_scale = lw["bn_x_g"] * lax.rsqrt(x_var + 1e-5)
        x_shift = lw["bn_x_b"] - x_mean * x_scale

        # fused BN + ReLU + residual for both paths (lane-dense (nN, E*H) view of the e path)
        e_new2, x = bn_apply(
            e_tmp.reshape(nN, E * H), e.reshape(nN, E * H),
            jnp.tile(e_scale, E).reshape(1, E * H), jnp.tile(e_shift, E).reshape(1, E * H),
            x_tmp, x, x_scale.reshape(1, H), x_shift.reshape(1, H), TN)
        e = e_new2.reshape(nE, H)

    # edge MLP head fused with the per-node probability normalisation
    logp, log1mp = edge_head(e, params["mlp_e_hidden"], params["mlp_e_out"], TN, E)    # (nN, E) each
    y_pred_edges = jnp.stack([log1mp.reshape(B, V * E), logp.reshape(B, V * E)], axis=2)

    # NLL loss with class weights (reduction='none'); tiny XLA glue
    if y_edges is not None:
        y_edges = y_edges.astype(jnp.int32)
        sel = jnp.take_along_axis(y_pred_edges, y_edges[:, :, None], axis=2)[:, :, 0]
        loss_full = (-edge_cw[y_edges] * sel).reshape(B, V, E)
    else:
        loss_full = None

    # node MLP head (fused, incl. 10*tanh)
    node_out = node_head(x, params["mlp_n_hidden"], params["mlp_n_out"], TN)           # (nN, 1)
    y_pred_nodes = node_out.reshape(B, V, 1)

    return y_pred_edges, loss_full, loss_mask, y_pred_nodes


# ----------------------------- demo -----------------------------

if __name__ == "__main__":
    B, V, E = 2, 16, 8
    hidden_dim, n_gcn_layers, n_mlp_layers = 32, 3, 3

    key = jax.random.PRNGKey(0)
    kp, kx, ke, ki, kinv, ky = jax.random.split(key, 6)
    params = init_sparse_gcn_params(kp, hidden_dim, n_gcn_layers, n_mlp_layers, "tsp")

    x_nodes = jax.random.uniform(kx, (B, V, 2), jnp.float32)            # node coords
    x_edges = jax.random.uniform(ke, (B, V * E, 1), jnp.float32)        # edge distances
    edge_index = jax.random.randint(ki, (B, V * E), 0, V, jnp.int32)    # neighbor node ids
    inverse_edge_index = jax.random.randint(kinv, (B, V * E), 0, V * E, jnp.int32)
    y_edges = jax.random.randint(ky, (B, V * E), 0, 2, jnp.int32)
    edge_cw = jnp.array([1.0, 3.0], jnp.float32)

    y_pred_edges, loss_full, loss_mask, y_pred_nodes = sparse_gcn_forward(
        params, x_nodes, x_edges, edge_index, inverse_edge_index, y_edges, edge_cw, E)

    jax.block_until_ready((y_pred_edges, loss_full, loss_mask, y_pred_nodes))

    # torch: loss.view(B, V, E)[loss_mask] -- dynamic-size boolean masking, done on host.
    loss = np.asarray(loss_full)[np.asarray(loss_mask)]

    assert y_pred_edges.shape == (B, V * E, 2)
    assert y_pred_nodes.shape == (B, V, 1)
    assert loss.shape[1] == E
    assert np.isfinite(np.asarray(y_pred_nodes)).all()
    print("KERNEL_OK")
</pallas_src>

<mosaic_0001>
module attributes {stable_mosaic.version = 11 : i64} {
  func.func @_node_embed_kernel(%arg0: i32, %arg1: memref<16x2xf32, #tpu.memory_space<vmem>>, %arg2: memref<2x32xf32, #tpu.memory_space<vmem>>, %arg3: memref<16x32xbf16, #tpu.memory_space<vmem>>) attributes {dimension_semantics = [#tpu.dimension_semantics<parallel>], iteration_bounds = array<i64: 2>, scalar_prefetch = 0 : i64, scratch_operands = 0 : i64, tpu.core_type = #tpu.core_type<tc>, window_params = [{transform_indices = @transform_0, window_bounds = array<i64: 16, 2>}, {pipeline_mode = #tpu.pipeline_mode<synchronous>, transform_indices = @transform_1, window_bounds = array<i64: 2, 32>}, {transform_indices = @transform_2, window_bounds = array<i64: 16, 32>}]} {
    %c0 = arith.constant 0 : index
    %c0_0 = arith.constant 0 : index
    %0 = vector.load %arg1[%c0, %c0_0] : memref<16x2xf32, #tpu.memory_space<vmem>>, vector<16x2xf32>
    %c0_1 = arith.constant 0 : index
    %c0_2 = arith.constant 0 : index
    %1 = vector.load %arg2[%c0_1, %c0_2] : memref<2x32xf32, #tpu.memory_space<vmem>>, vector<2x32xf32>
    %2 = vector.extract_strided_slice %0 {offsets = [0, 0], sizes = [16, 1], strides = [1, 1]} : vector<16x2xf32> to vector<16x1xf32>
    %3 = vector.extract_strided_slice %1 {offsets = [0, 0], sizes = [1, 32], strides = [1, 1]} : vector<2x32xf32> to vector<1x32xf32>
    %4 = vector.broadcast %2 : vector<16x1xf32> to vector<16x32xf32>
    %5 = vector.broadcast %3 : vector<1x32xf32> to vector<16x32xf32>
    %6 = arith.mulf %4, %5 : vector<16x32xf32>
    %7 = vector.extract_strided_slice %0 {offsets = [0, 1], sizes = [16, 1], strides = [1, 1]} : vector<16x2xf32> to vector<16x1xf32>
    %8 = vector.extract_strided_slice %1 {offsets = [1, 0], sizes = [1, 32], strides = [1, 1]} : vector<2x32xf32> to vector<1x32xf32>
    %9 = vector.broadcast %7 : vector<16x1xf32> to vector<16x32xf32>
    %10 = vector.broadcast %8 : vector<1x32xf32> to vector<16x32xf32>
    %11 = arith.mulf %9, %10 : vector<16x32xf32>
    %12 = arith.addf %6, %11 : vector<16x32xf32>
    %13 = arith.truncf %12 : vector<16x32xf32> to vector<16x32xbf16>
    %c0_3 = arith.constant 0 : index
    %c0_4 = arith.constant 0 : index
    %14 = vector.load %arg3[%c0_3, %c0_4] : memref<16x32xbf16, #tpu.memory_space<vmem>>, vector<16x32xbf16>
    tpu.vector_store %arg3[%c0_3, %c0_4], %13 {strides = array<i32>} : memref<16x32xbf16, #tpu.memory_space<vmem>>, vector<16x32xbf16>,
    return
  }
  func.func @transform_0(%arg0: i32) -> (i32, i32) {
    %c0_i32 = arith.constant 0 : i32
    %c0_i32_0 = arith.constant 0 : i32
    return %arg0, %c0_i32 : i32, i32
  }
  func.func @transform_1(%arg0: i32) -> (i32, i32) {
    %c0_i32 = arith.constant 0 : i32
    %c0_i32_0 = arith.constant 0 : i32
    %c0_i32_1 = arith.constant 0 : i32
    return %c0_i32, %c0_i32_0 : i32, i32
  }
  func.func @transform_2(%arg0: i32) -> (i32, i32) {
    %c0_i32 = arith.constant 0 : i32
    %c0_i32_0 = arith.constant 0 : i32
    return %arg0, %c0_i32 : i32, i32
  }
}

</mosaic_0001>

<llo_original>
// kernel: tpu_custom_call.1
$region0: #{tpu_custom_call.1}
  #allocation0 [shape = 'u32[]', space=smem, size = 0x4, offset = 0x4, fixed_abs, tag = 'smem constant byte address 0x4 - core index']
  #allocation1 [shape = 'u32[72,128]{1,0:T(1,128)}', space=vmem, size = 0x9000, scoped, tag = 'internal scratch']
  %s0 = inlined_call_operand.vmem [shape: f32[32,2], index: 0, kind: input, shape index: {}]
  %s1 = inlined_call_operand.vmem [shape: f32[2,32], index: 1, kind: input, shape index: {}]
  %s2 = inlined_call_operand.hbm [shape: bf16[32,32], index: 2, kind: output, shape index: {}]
  %s3 = sld [smem:[#allocation0]]
  $region41: #{tpu_custom_call.1} parent=0
    _
  %s5 = ssub.s32 1, %s3
  %s6 = scalar_select 0, %s5, %s3
  $region1: #{tpu_custom_call.1} parent=0
    #allocation2 [shape = 'u8[8192]{0}', space=vmem, size = 0x2000, scoped, tag = 'output window, operand 0']
    #allocation3 [shape = 's32[2]{0}', space=sflag, size = 0x8, scoped, tag = 'scoped memory for tpu_custom_call.1']
    %7 = vsyncpa [#allocation3], 0
    %s8 = scalar_lea.sflag [#allocation3], 1
    %9 = vsyncpa %s8, 0
    loop: start=0, step=1, limit=4
    $region2: #{tpu_custom_call.1} parent=1 // loop_pre_header
      _
    $region3: #{tpu_custom_call.1} parent=1 // loop_header
      %s11 = sphi 0, %s15
      %p12 = scmp.ge.s32.totalorder %s11, 4
      %s21 = sphi 0, %s23
      %s24 = sphi 0, %s21
      %s25 = sphi 0, %s24
      %s41 = sphi 0, %s25
      %s45 = sphi 0, %s45
      %s47 = sphi 0, %s45
      %s48 = sphi 0, %s47
      %s62 = sphi 0, %s48
      %s68 = sphi 0, %s70
      %s71 = sphi 0, %s68
      %s72 = sphi 0, %s71
      %s88 = sphi 0, %s72
    $region4: #{tpu_custom_call.1} parent=1 // loop_header_branch
      %14 = sbr.rel (%p12) target = $region8
    $region5: #{tpu_custom_call.1} parent=1 // loop_body
      %s16 = ssub.s32 %s11, 1
      %s17 = ssub.s32 %s11, 2
      %s18 = sadd.s32 %s11, 1
      %s19 = ssub.s32 %s11, %s18
      %p20 = scmp.eq.s32.totalorder %s19, 0
      %s22 = sadd.s32 %s21, 1
      %s23 = scalar_select %p20, %s21, %s22
      %p26 = pneg %p20
      %p27 = scmp.eq.s32.totalorder %s11, 1
      %p28 = por %p26, %p27
      %p29 = scmp.ne.s32.totalorder %s21, %s24
      %p30 = scmp.eq.s32.totalorder %s11, 0
      %p31 = por %p29, %p30
      %p32 = scmp.ne.s32.totalorder %s21, %s24
      %p33 = scmp.eq.s32.totalorder %s16, 1
      %p34 = por %p32, %p33
      %p35 = scmp.ne.s32.totalorder %s24, %s25
      %p36 = scmp.eq.s32.totalorder %s16, 0
      %p37 = por %p35, %p36
      %p38 = scmp.ne.s32.totalorder %s24, %s25
      %p39 = scmp.eq.s32.totalorder %s17, 1
      %p40 = por %p38, %p39
      %p42 = scmp.ne.s32.totalorder %s25, %s41
      %p43 = scmp.eq.s32.totalorder %s17, 0
      %p44 = por %p42, %p43
      %s46 = sadd.s32 %s45, 1
      %p49 = scmp.eq.s32.totalorder %s11, 1
      %p50 = scmp.ne.s32.totalorder %s45, %s47
      %p51 = scmp.eq.s32.totalorder %s11, 0
      %p52 = por %p50, %p51
      %p53 = scmp.ne.s32.totalorder %s45, %s47
      %p54 = scmp.eq.s32.totalorder %s16, 1
      %p55 = por %p53, %p54
      %p56 = scmp.ne.s32.totalorder %s47, %s48
      %p57 = scmp.eq.s32.totalorder %s16, 0
      %p58 = por %p56, %p57
      %p59 = scmp.ne.s32.totalorder %s47, %s48
      %p60 = scmp.eq.s32.totalorder %s17, 1
      %p61 = por %p59, %p60
      %p63 = scmp.ne.s32.totalorder %s48, %s62
      %p64 = scmp.eq.s32.totalorder %s17, 0
      %p65 = por %p63, %p64
      %s66 = ssub.s32 %s11, %s18
      %p67 = scmp.eq.s32.totalorder %s66, 0
      %s69 = sadd.s32 %s68, 1
      %s70 = scalar_select %p67, %s68, %s69
      %p73 = pneg %p67
      %p74 = scmp.eq.s32.totalorder %s11, 1
      %p75 = por %p73, %p74
      %p76 = scmp.ne.s32.totalorder %s68, %s71
      %p77 = scmp.eq.s32.totalorder %s11, 0
      %p78 = por %p76, %p77
      %p79 = scmp.ne.s32.totalorder %s68, %s71
      %p80 = scmp.eq.s32.totalorder %s16, 1
      %p81 = por %p79, %p80
      %p82 = scmp.ne.s32.totalorder %s71, %s72
      %p83 = scmp.eq.s32.totalorder %s16, 0
      %p84 = por %p82, %p83
      %p85 = scmp.ne.s32.totalorder %s71, %s72
      %p86 = scmp.eq.s32.totalorder %s17, 1
      %p87 = por %p85, %p86
      %p89 = scmp.ne.s32.totalorder %s72, %s88
      %p90 = scmp.eq.s32.totalorder %s17, 0
      %p91 = por %p89, %p90
      %p92 = scmp.le.s32.totalorder 1, %s11
      %p93 = scmp.lt.s32.totalorder %s11, 3
      %p94 = pnand %p92, %p93
      %p95 = pneg %p94
      // Predicated region
      $region9: #{tpu_custom_call.1} parent=5 // pred_check
        _
      $region10: #{tpu_custom_call.1} parent=5 // pred_check_branch
        %97 = sbr.rel (%p94) target = $region12
      $region11: #{tpu_custom_call.1} parent=5 // pred_region
        %s98 = ssub.s32 %s11, 1
        // Predicated region
        $region13: #{tpu_custom_call.1} parent=11 // pred_check
          %p99 = pneg %p58
        $region14: #{tpu_custom_call.1} parent=11 // pred_check_branch
          %101 = sbr.rel (%p99) target = $region16
        $region15: #{tpu_custom_call.1} parent=11 // pred_region
          _
        $region16: #{tpu_custom_call.1} parent=11 // pred_fallthru
          _
      $region12: #{tpu_custom_call.1} parent=5 // pred_fallthru
        _
      %p102 = scmp.lt.s32.totalorder %s11, 2
      // Predicated region
      $region17: #{tpu_custom_call.1} parent=5 // pred_check
        %p103 = pneg %p102
      $region18: #{tpu_custom_call.1} parent=5 // pred_check_branch
        %105 = sbr.rel (%p103) target = $region20
      $region19: #{tpu_custom_call.1} parent=5 // pred_region
        // Predicated region
        $region21: #{tpu_custom_call.1} parent=19 // pred_check
          %p106 = pneg %p31
        $region22: #{tpu_custom_call.1} parent=19 // pred_check_branch
          %108 = sbr.rel (%p106) target = $region24
        $region23: #{tpu_custom_call.1} parent=19 // pred_region
          %s109 = smul.u32 2, %s11
          %p110 = scmp.lt.s32.totalorder %s109, 3
          %s111 = scalar_select %p110, %s109, 3
          %s112 = smul.addr %s111, 8
          %s113 = scalar_lea.vmem %s0, %s112
          %s114 = smul.u32 2, %s11
        $region24: #{tpu_custom_call.1} parent=19 // pred_fallthru
          _
      $region20: #{tpu_custom_call.1} parent=5 // pred_fallthru
        _
      %p115 = scmp.le.s32.totalorder 1, %s11
      %p116 = scmp.lt.s32.totalorder %s11, 3
      %p117 = pnand %p115, %p116
      %p118 = pneg %p117
      // Predicated region
      $region25: #{tpu_custom_call.1} parent=5 // pred_check
        _
      $region26: #{tpu_custom_call.1} parent=5 // pred_check_branch
        %120 = sbr.rel (%p117) target = $region28
      $region27: #{tpu_custom_call.1} parent=5 // pred_region
        %s121 = ssub.s32 %s11, 1
        %s122 = smul.u32 2, %s16
        %p123 = scmp.lt.s32.totalorder %s122, 3
        %s124 = scalar_select %p123, %s122, 3
        %s125 = smul.addr %s124, 8
        %s126 = scalar_lea.vmem %s0, %s125
        %p127 = pneg %p37
        %p128 = pneg %p34
        %p129 = pneg %p58
        %p130 = pneg %p55
        %p131 = pneg %p84
        %p132 = pneg %p81
        %s133 = sand.u32 %s71, 1
        %s134 = scalar_lea.sflag [#allocation3], %s133
        %s135 = sand.u32 %s71, 1
        %s136 = smul.addr %s135, 8
        %s137 = scalar_lea.vmem [#allocation2], %s136
        %s138 = smul.u32 2, %s16
        %p139 = scmp.lt.s32.totalorder %s138, 3
        %s140 = scalar_select %p139, %s138, 3
        %s141 = smul.addr %s140, 8
        %s142 = scalar_lea.vmem %s0, %s141
        %s143 = smul.u32 2, %s16
        %s144 = smul.u32 2, %s16
        %v145 = vld [vmem:[%s142] sm:$0xff]
        %v146 = vld [vmem:[%s142 + $0x8] sm:$0xff]
        %v147 = vld [vmem:[%s1] sm:$0x3]
        %149 = vset.pattern.permute.xlu0 0
        %150 = vperm.xlu0 %149, %v145
        %v151 = vpop.permute.xlu0 %150
        %154 = vset.pattern.permute.xlu0 0
        %155 = vperm.xlu0 %154, %v146
        %v156 = vpop.permute.xlu0 %155
        %v158 = vperm.slane %v147, 0
        %v159 = vmul.f32 %v151, %v158
        %v160 = vmul.f32 %v156, %v158
        %161 = vset.pattern.permute.xlu0 1
        %162 = vperm.xlu0 %161, %v145
        %v163 = vpop.permute.xlu0 %162
        %165 = vset.pattern.permute.xlu0 1
        %166 = vperm.xlu0 %165, %v146
        %v167 = vpop.permute.xlu0 %166
        %v169 = vperm.slane %v147, 1
        %v170 = vmul.f32 %v163, %v169
        %v171 = vmul.f32 %v167, %v169
        %v172 = vadd.f32 %v159, %v170
        %v173 = vadd.f32 %v160, %v171
        %v174 = vpack.c.bf16 %v172, %v172
        %v175 = vpack.c.bf16 %v173, %v173
        %vm176 = vcmask 257024
        %177 = vst.msk [vmem:[%s137] sm:$0xf] %vm176, %v174
        %178 = vst.msk [vmem:[%s137 + $0x4] sm:$0xf] %vm176, %v175
        %s179 = sand.u32 %s71, 1
        %s180 = scalar_lea.sflag [#allocation3], %s179
        %s181 = sand.u32 %s71, 1
        %s182 = smul.addr %s181, 8
        %s183 = scalar_lea.vmem [#allocation2], %s182
        // Predicated region
        $region29: #{tpu_custom_call.1} parent=27 // pred_check
          %p184 = pneg %p81
        $region30: #{tpu_custom_call.1} parent=27 // pred_check_branch
          %186 = sbr.rel (%p184) target = $region32
        $region31: #{tpu_custom_call.1} parent=27 // pred_region
          %s187 = smul.u32 2, %s16
          %189 = vsyncadd %s180, 0
          %s190 = smul.addr %s187, 4
          %s191 = scalar_lea.hbm %s2, %s190
          %s192 = sshll.u32 %s183, 4
          %s193 = int_to_ptr.vmem [resolvable:$true] %s192
          %s194 = sshll.u32 %s191, 4
          %s195 = int_to_ptr.hbm [resolvable:$true] %s194
          %200 = dma.vmem_to_hbm [thread:$0]  %s193, 128, %s195, %s180, 64, 64, 4
        $region32: #{tpu_custom_call.1} parent=27 // pred_fallthru
          _
      $region28: #{tpu_custom_call.1} parent=5 // pred_fallthru
        _
      %p201 = scmp.le.s32.totalorder 2, %s11
      // Predicated region
      $region33: #{tpu_custom_call.1} parent=5 // pred_check
        %p202 = pneg %p201
      $region34: #{tpu_custom_call.1} parent=5 // pred_check_branch
        %204 = sbr.rel (%p202) target = $region36
      $region35: #{tpu_custom_call.1} parent=5 // pred_region
        %s205 = ssub.s32 %s11, 2
        // Predicated region
        $region37: #{tpu_custom_call.1} parent=35 // pred_check
          %p206 = pneg %p87
        $region38: #{tpu_custom_call.1} parent=35 // pred_check_branch
          %208 = sbr.rel (%p206) target = $region40
        $region39: #{tpu_custom_call.1} parent=35 // pred_region
          %s209 = sand.u32 %s72, 1
          %s210 = scalar_lea.sflag [#allocation3], %s209
          %s211 = sand.u32 %s72, 1
          %s212 = smul.addr %s211, 8
          %s213 = scalar_lea.vmem [#allocation2], %s212
          %215 = dma.done %s210, 128
        $region40: #{tpu_custom_call.1} parent=35 // pred_fallthru
          _
      $region36: #{tpu_custom_call.1} parent=5 // pred_fallthru
        _
    $region6: #{tpu_custom_call.1} parent=1 // loop_footer
      %s15 = sadd.s32 1, %s11
    $region7: #{tpu_custom_call.1} parent=1 // loop_footer_branch
      %10 = sbr.rel target = $region3
    $region8: #{tpu_custom_call.1} parent=1 // loop_exit
      _
    %216 = vsyncpa [#allocation3], 1
    %s217 = scalar_lea.sflag [#allocation3], 1
    %218 = vsyncpa %s217, 1

</llo_original>
